<compile_context>
chip_gen: v5e
topology: v5e:2x2
jax: 0.10.0
libtpu: 0.0.40
codegen_flags: <defaults>
</compile_context>

<pallas_src>
import jax
import jax.numpy as jnp
from jax.experimental import pallas as pl
from jax.experimental.pallas import tpu as pltpu


def _round_up(x, m):
    return ((x + m - 1) // m) * m


def _cdiv(a, b):
    return (a + b - 1) // b


def critic_kernel(s_ref, a_ref,
                  w1s_ref, w1a_ref, b1_ref,
                  w2_ref, b2_ref,
                  w3_ref, b3_ref,
                  w4_ref, b4_ref,
                  w5_ref, b5_ref,
                  out_ref):
    # Layer 1 without materializing concat([state, action], 1):
    #   relu(state @ W1_s + action @ W1_a + b1); bf16 MXU operands, f32 accumulate.
    h = jnp.dot(s_ref[...].astype(jnp.bfloat16), w1s_ref[...],
                preferred_element_type=jnp.float32)
    h = h + jnp.dot(a_ref[...].astype(jnp.bfloat16), w1a_ref[...],
                    preferred_element_type=jnp.float32)
    h = jnp.maximum(h + b1_ref[...], 0.0)

    # Hidden layers 2-4 on the MXU (hidden padded to 128 lanes -> lane-dense).
    for w_ref, b_ref in ((w2_ref, b2_ref), (w3_ref, b3_ref), (w4_ref, b4_ref)):
        h = jnp.dot(h.astype(jnp.bfloat16), w_ref[...],
                    preferred_element_type=jnp.float32)
        h = jnp.maximum(h + b_ref[...], 0.0)

    # Output head (H -> 1): transpose so the result is lane-dense, then a VPU
    # broadcast-multiply + sublane reduce (keeps the MXU free, avoids an N=1
    # matmul and a (tile_b, 1) masked-store output block).
    h_t = h.T                                             # (H_pad, tile_b) f32
    q = jnp.sum(h_t * w5_ref[...], axis=0, keepdims=True) + b5_ref[...]  # (1, tile_b)
    out_ref[...] = q[None].astype(out_ref.dtype)          # (1, 1, tile_b) lane-dense


def critic_forward(state, action, params, *, max_tile_b=1024):
    """state: (B, state_dim) f32, action: (B, action_dim) f32.
    params: list of (W, b) with W shape (in, out), b shape (1, out)."""
    B, state_dim = state.shape
    action_dim = action.shape[1]

    (w1, b1), (w2, b2), (w3, b3), (w4, b4), (w5, b5) = params
    hidden = w1.shape[1]
    hp = _round_up(hidden, 128)          # lane-dense padded hidden width
    pad_c = hp - hidden

    # Weight prep (once, tiny arrays):
    #  * split W1 so the (B, state_dim+action_dim) concat never hits HBM,
    #  * zero-pad hidden to 128 lanes (exact: padded cols/rows contribute 0),
    #  * bf16 matmul weights, f32 biases / head weight.
    w1_s = jnp.pad(w1[:state_dim], ((0, 0), (0, pad_c))).astype(jnp.bfloat16)
    w1_a = jnp.pad(w1[state_dim:], ((0, 0), (0, pad_c))).astype(jnp.bfloat16)
    b1_p = jnp.pad(b1, ((0, 0), (0, pad_c)))
    w2_p = jnp.pad(w2, ((0, pad_c), (0, pad_c))).astype(jnp.bfloat16)
    b2_p = jnp.pad(b2, ((0, 0), (0, pad_c)))
    w3_p = jnp.pad(w3, ((0, pad_c), (0, pad_c))).astype(jnp.bfloat16)
    b3_p = jnp.pad(b3, ((0, 0), (0, pad_c)))
    w4_p = jnp.pad(w4, ((0, pad_c), (0, pad_c))).astype(jnp.bfloat16)
    b4_p = jnp.pad(b4, ((0, 0), (0, pad_c)))
    w5_col = jnp.pad(w5, ((0, pad_c), (0, 0)))            # (hp, 1) f32
    b5_11 = b5.reshape(1, 1)

    # Batch tiling: large tiles to amortize per-grid-step overhead, multiple of
    # 128 so the in-kernel transpose / output store stay lane-aligned, and at
    # most ~half the batch so v7x's two TensorCores both get a grid step.
    b_pad = _round_up(B, 8)
    tile_b = min(max_tile_b, max(128, _round_up(_cdiv(b_pad, 2), 128)))
    if b_pad < tile_b:
        # Tiny batches: trivially cheap to pad up to one full tile.
        b_pad = tile_b
    if b_pad != B:
        state = jnp.pad(state, ((0, b_pad - B), (0, 0)))
        action = jnp.pad(action, ((0, b_pad - B), (0, 0)))
    grid_n = _cdiv(b_pad, tile_b)   # ragged last block handled by Pallas padding

    def batch_map(i):
        return (i, 0)

    def const_map(i):
        return (0, 0)

    def full_spec(arr):
        # Grid-invariant operand: constant block index -> fetched once, resident in VMEM.
        return pl.BlockSpec(arr.shape, const_map)

    in_specs = [
        pl.BlockSpec((tile_b, state_dim), batch_map),
        pl.BlockSpec((tile_b, action_dim), batch_map),
        full_spec(w1_s), full_spec(w1_a), full_spec(b1_p),
        full_spec(w2_p), full_spec(b2_p),
        full_spec(w3_p), full_spec(b3_p),
        full_spec(w4_p), full_spec(b4_p),
        full_spec(w5_col), full_spec(b5_11),
    ]

    out = pl.pallas_call(
        critic_kernel,
        out_shape=jax.ShapeDtypeStruct((grid_n, 1, tile_b), jnp.float32),
        grid=(grid_n,),
        in_specs=in_specs,
        out_specs=pl.BlockSpec((1, 1, tile_b), lambda i: (i, 0, 0)),
        compiler_params=pltpu.CompilerParams(
            dimension_semantics=("parallel",)),
    )(state, action, w1_s, w1_a, b1_p, w2_p, b2_p, w3_p, b3_p, w4_p, b4_p,
      w5_col, b5_11)

    # Lane-dense (grid_n, 1, tile_b) -> (B, 1); rows past B are padded garbage.
    return out.reshape(grid_n * tile_b, 1)[:B]


def init_linear_params(key, fan_in, fan_out):
    """Deterministic init mimicking PyTorch nn.Linear default (uniform +/- 1/sqrt(fan_in))."""
    kw, kb = jax.random.split(key)
    bound = 1.0 / jnp.sqrt(jnp.asarray(fan_in, jnp.float32))
    # Stored as (in, out) so the kernel computes x @ W.
    w = jax.random.uniform(kw, (fan_in, fan_out), jnp.float32, -bound, bound)
    b = jax.random.uniform(kb, (1, fan_out), jnp.float32, -bound, bound)
    return w, b


def reference_forward(state, action, params):
    """Pure-JAX reference mirroring the kernel numerics (bf16 MXU operands,
    f32 accumulation, f32 bias/ReLU and f32 head)."""
    (w1, b1), (w2, b2), (w3, b3), (w4, b4), (w5, b5) = params
    h = jnp.concatenate([state, action], axis=1)
    for w, b in ((w1, b1), (w2, b2), (w3, b3), (w4, b4)):
        h = jnp.dot(h.astype(jnp.bfloat16), w.astype(jnp.bfloat16),
                    preferred_element_type=jnp.float32)
        h = jnp.maximum(h + b, 0.0)
    return jnp.sum(h * w5.reshape(1, -1), axis=-1, keepdims=True) + b5


if __name__ == "__main__":
    key = jax.random.PRNGKey(0)

    batch = 2
    state_dim = 8
    action_dim = 4
    hidden_size = 32

    k_state, k_action, k1, k2, k3, k4, k5 = jax.random.split(key, 7)

    state = jax.random.normal(k_state, (batch, state_dim), jnp.float32)
    action = jax.random.normal(k_action, (batch, action_dim), jnp.float32)

    params = [
        init_linear_params(k1, state_dim + action_dim, hidden_size),  # l1
        init_linear_params(k2, hidden_size, hidden_size),             # l2
        init_linear_params(k3, hidden_size, hidden_size),             # l3
        init_linear_params(k4, hidden_size, hidden_size),             # l4
        init_linear_params(k5, hidden_size, 1),                       # l5
    ]

    # Small batch (module-spec-sized) check.
    out = jax.block_until_ready(critic_forward(state, action, params))
    ref = reference_forward(state, action, params)
    assert out.shape == (batch, 1)
    assert jnp.allclose(out, ref, atol=2e-3, rtol=2e-3), float(jnp.abs(out - ref).max())

    # Larger, non-multiple batch: exercises >=2 grid steps (v7x TC sharding) and
    # the ragged boundary block (no host pad-to-tile).
    kb_s, kb_a = jax.random.split(jax.random.PRNGKey(1))
    big_b = 300
    state_b = jax.random.normal(kb_s, (big_b, state_dim), jnp.float32)
    action_b = jax.random.normal(kb_a, (big_b, action_dim), jnp.float32)
    out_b = jax.block_until_ready(critic_forward(state_b, action_b, params))
    ref_b = reference_forward(state_b, action_b, params)
    assert out_b.shape == (big_b, 1)
    assert jnp.allclose(out_b, ref_b, atol=2e-3, rtol=2e-3), float(jnp.abs(out_b - ref_b).max())

    print("KERNEL_OK")
</pallas_src>

<mosaic_0001>
module attributes {stable_mosaic.version = 11 : i64} {
  func.func @critic_kernel(%arg0: i32, %arg1: memref<128x8xf32, #tpu.memory_space<vmem>>, %arg2: memref<128x4xf32, #tpu.memory_space<vmem>>, %arg3: memref<8x128xbf16, #tpu.memory_space<vmem>>, %arg4: memref<4x128xbf16, #tpu.memory_space<vmem>>, %arg5: memref<1x128xf32, #tpu.memory_space<vmem>>, %arg6: memref<128x128xbf16, #tpu.memory_space<vmem>>, %arg7: memref<1x128xf32, #tpu.memory_space<vmem>>, %arg8: memref<128x128xbf16, #tpu.memory_space<vmem>>, %arg9: memref<1x128xf32, #tpu.memory_space<vmem>>, %arg10: memref<128x128xbf16, #tpu.memory_space<vmem>>, %arg11: memref<1x128xf32, #tpu.memory_space<vmem>>, %arg12: memref<128x1xf32, #tpu.memory_space<vmem>>, %arg13: memref<1x1xf32, #tpu.memory_space<vmem>>, %arg14: memref<1x1x128xf32, #tpu.memory_space<vmem>>) attributes {dimension_semantics = [#tpu.dimension_semantics<parallel>], iteration_bounds = array<i64: 1>, scalar_prefetch = 0 : i64, scratch_operands = 0 : i64, tpu.core_type = #tpu.core_type<tc>, window_params = [{transform_indices = @transform_0, window_bounds = array<i64: 128, 8>}, {transform_indices = @transform_1, window_bounds = array<i64: 128, 4>}, {pipeline_mode = #tpu.pipeline_mode<synchronous>, transform_indices = @transform_2, window_bounds = array<i64: 8, 128>}, {pipeline_mode = #tpu.pipeline_mode<synchronous>, transform_indices = @transform_3, window_bounds = array<i64: 4, 128>}, {pipeline_mode = #tpu.pipeline_mode<synchronous>, transform_indices = @transform_4, window_bounds = array<i64: 1, 128>}, {pipeline_mode = #tpu.pipeline_mode<synchronous>, transform_indices = @transform_5, window_bounds = array<i64: 128, 128>}, {pipeline_mode = #tpu.pipeline_mode<synchronous>, transform_indices = @transform_6, window_bounds = array<i64: 1, 128>}, {pipeline_mode = #tpu.pipeline_mode<synchronous>, transform_indices = @transform_7, window_bounds = array<i64: 128, 128>}, {pipeline_mode = #tpu.pipeline_mode<synchronous>, transform_indices = @transform_8, window_bounds = array<i64: 1, 128>}, {pipeline_mode = #tpu.pipeline_mode<synchronous>, transform_indices = @transform_9, window_bounds = array<i64: 128, 128>}, {pipeline_mode = #tpu.pipeline_mode<synchronous>, transform_indices = @transform_10, window_bounds = array<i64: 1, 128>}, {pipeline_mode = #tpu.pipeline_mode<synchronous>, transform_indices = @transform_11, window_bounds = array<i64: 128, 1>}, {pipeline_mode = #tpu.pipeline_mode<synchronous>, transform_indices = @transform_12, window_bounds = array<i64: 1, 1>}, {transform_indices = @transform_13, window_bounds = array<i64: 1, 1, 128>}]} {
    %c0 = arith.constant 0 : index
    %c0_0 = arith.constant 0 : index
    %0 = vector.load %arg1[%c0, %c0_0] : memref<128x8xf32, #tpu.memory_space<vmem>>, vector<128x8xf32>
    %1 = arith.truncf %0 : vector<128x8xf32> to vector<128x8xbf16>
    %c0_1 = arith.constant 0 : index
    %c0_2 = arith.constant 0 : index
    %2 = vector.load %arg3[%c0_1, %c0_2] : memref<8x128xbf16, #tpu.memory_space<vmem>>, vector<8x128xbf16>
    %cst = arith.constant dense<0.000000e+00> : vector<128x128xf32>
    %3 = tpu.matmul %1, %2, %cst {dimension_numbers = #tpu.dot_dimension_numbers<[1], [0], [0], [1], [0, 0, 1, 1], [], []>} : vector<128x8xbf16>, vector<8x128xbf16>, vector<128x128xf32> -> vector<128x128xf32>
    %c0_3 = arith.constant 0 : index
    %c0_4 = arith.constant 0 : index
    %4 = vector.load %arg2[%c0_3, %c0_4] : memref<128x4xf32, #tpu.memory_space<vmem>>, vector<128x4xf32>
    %5 = arith.truncf %4 : vector<128x4xf32> to vector<128x4xbf16>
    %c0_5 = arith.constant 0 : index
    %c0_6 = arith.constant 0 : index
    %6 = vector.load %arg4[%c0_5, %c0_6] : memref<4x128xbf16, #tpu.memory_space<vmem>>, vector<4x128xbf16>
    %cst_7 = arith.constant dense<0.000000e+00> : vector<128x128xf32>
    %7 = tpu.matmul %5, %6, %cst_7 {dimension_numbers = #tpu.dot_dimension_numbers<[1], [0], [0], [1], [0, 0, 1, 1], [], []>} : vector<128x4xbf16>, vector<4x128xbf16>, vector<128x128xf32> -> vector<128x128xf32>
    %8 = arith.addf %3, %7 : vector<128x128xf32>
    %c0_8 = arith.constant 0 : index
    %c0_9 = arith.constant 0 : index
    %9 = vector.load %arg5[%c0_8, %c0_9] : memref<1x128xf32, #tpu.memory_space<vmem>>, vector<1x128xf32>
    %10 = vector.broadcast %9 : vector<1x128xf32> to vector<128x128xf32>
    %11 = arith.addf %8, %10 : vector<128x128xf32>
    %cst_10 = arith.constant 0.000000e+00 : f32
    %12 = vector.broadcast %cst_10 : f32 to vector<128x128xf32>
    %13 = arith.maximumf %11, %12 : vector<128x128xf32>
    %14 = arith.truncf %13 : vector<128x128xf32> to vector<128x128xbf16>
    %c0_11 = arith.constant 0 : index
    %c0_12 = arith.constant 0 : index
    %15 = vector.load %arg6[%c0_11, %c0_12] : memref<128x128xbf16, #tpu.memory_space<vmem>>, vector<128x128xbf16>
    %cst_13 = arith.constant dense<0.000000e+00> : vector<128x128xf32>
    %16 = tpu.matmul %14, %15, %cst_13 {dimension_numbers = #tpu.dot_dimension_numbers<[1], [0], [0], [1], [0, 0, 1, 1], [], []>} : vector<128x128xbf16>, vector<128x128xbf16>, vector<128x128xf32> -> vector<128x128xf32>
    %c0_14 = arith.constant 0 : index
    %c0_15 = arith.constant 0 : index
    %17 = vector.load %arg7[%c0_14, %c0_15] : memref<1x128xf32, #tpu.memory_space<vmem>>, vector<1x128xf32>
    %18 = vector.broadcast %17 : vector<1x128xf32> to vector<128x128xf32>
    %19 = arith.addf %16, %18 : vector<128x128xf32>
    %cst_16 = arith.constant 0.000000e+00 : f32
    %20 = vector.broadcast %cst_16 : f32 to vector<128x128xf32>
    %21 = arith.maximumf %19, %20 : vector<128x128xf32>
    %22 = arith.truncf %21 : vector<128x128xf32> to vector<128x128xbf16>
    %c0_17 = arith.constant 0 : index
    %c0_18 = arith.constant 0 : index
    %23 = vector.load %arg8[%c0_17, %c0_18] : memref<128x128xbf16, #tpu.memory_space<vmem>>, vector<128x128xbf16>
    %cst_19 = arith.constant dense<0.000000e+00> : vector<128x128xf32>
    %24 = tpu.matmul %22, %23, %cst_19 {dimension_numbers = #tpu.dot_dimension_numbers<[1], [0], [0], [1], [0, 0, 1, 1], [], []>} : vector<128x128xbf16>, vector<128x128xbf16>, vector<128x128xf32> -> vector<128x128xf32>
    %c0_20 = arith.constant 0 : index
    %c0_21 = arith.constant 0 : index
    %25 = vector.load %arg9[%c0_20, %c0_21] : memref<1x128xf32, #tpu.memory_space<vmem>>, vector<1x128xf32>
    %26 = vector.broadcast %25 : vector<1x128xf32> to vector<128x128xf32>
    %27 = arith.addf %24, %26 : vector<128x128xf32>
    %cst_22 = arith.constant 0.000000e+00 : f32
    %28 = vector.broadcast %cst_22 : f32 to vector<128x128xf32>
    %29 = arith.maximumf %27, %28 : vector<128x128xf32>
    %30 = arith.truncf %29 : vector<128x128xf32> to vector<128x128xbf16>
    %c0_23 = arith.constant 0 : index
    %c0_24 = arith.constant 0 : index
    %31 = vector.load %arg10[%c0_23, %c0_24] : memref<128x128xbf16, #tpu.memory_space<vmem>>, vector<128x128xbf16>
    %cst_25 = arith.constant dense<0.000000e+00> : vector<128x128xf32>
    %32 = tpu.matmul %30, %31, %cst_25 {dimension_numbers = #tpu.dot_dimension_numbers<[1], [0], [0], [1], [0, 0, 1, 1], [], []>} : vector<128x128xbf16>, vector<128x128xbf16>, vector<128x128xf32> -> vector<128x128xf32>
    %c0_26 = arith.constant 0 : index
    %c0_27 = arith.constant 0 : index
    %33 = vector.load %arg11[%c0_26, %c0_27] : memref<1x128xf32, #tpu.memory_space<vmem>>, vector<1x128xf32>
    %34 = vector.broadcast %33 : vector<1x128xf32> to vector<128x128xf32>
    %35 = arith.addf %32, %34 : vector<128x128xf32>
    %cst_28 = arith.constant 0.000000e+00 : f32
    %36 = vector.broadcast %cst_28 : f32 to vector<128x128xf32>
    %37 = arith.maximumf %35, %36 : vector<128x128xf32>
    %38 = tpu.transpose %37, [1, 0] : vector<128x128xf32> -> vector<128x128xf32>
    %c0_29 = arith.constant 0 : index
    %c0_30 = arith.constant 0 : index
    %39 = vector.load %arg12[%c0_29, %c0_30] : memref<128x1xf32, #tpu.memory_space<vmem>>, vector<128x1xf32>
    %40 = vector.broadcast %39 : vector<128x1xf32> to vector<128x128xf32>
    %41 = arith.mulf %38, %40 : vector<128x128xf32>
    %cst_31 = arith.constant dense<0.000000e+00> : vector<128xf32>
    %42 = vector.multi_reduction <add>, %41, %cst_31 [0] : vector<128x128xf32> to vector<128xf32>
    %43 = vector.shape_cast %42 : vector<128xf32> to vector<1x128xf32>
    %c0_32 = arith.constant 0 : index
    %c0_33 = arith.constant 0 : index
    %44 = vector.load %arg13[%c0_32, %c0_33] : memref<1x1xf32, #tpu.memory_space<vmem>>, vector<1x1xf32>
    %45 = vector.broadcast %44 : vector<1x1xf32> to vector<1x128xf32>
    %46 = arith.addf %43, %45 : vector<1x128xf32>
    %47 = vector.shape_cast %46 : vector<1x128xf32> to vector<1x1x128xf32>
    %c0_34 = arith.constant 0 : index
    %c0_35 = arith.constant 0 : index
    %c0_36 = arith.constant 0 : index
    %48 = vector.load %arg14[%c0_34, %c0_35, %c0_36] : memref<1x1x128xf32, #tpu.memory_space<vmem>>, vector<1x1x128xf32>
    tpu.vector_store %arg14[%c0_34, %c0_35, %c0_36], %47 {strides = array<i32>} : memref<1x1x128xf32, #tpu.memory_space<vmem>>, vector<1x1x128xf32>,
    return
  }
  func.func @transform_0(%arg0: i32) -> (i32, i32) {
    %c0_i32 = arith.constant 0 : i32
    %c0_i32_0 = arith.constant 0 : i32
    return %arg0, %c0_i32 : i32, i32
  }
  func.func @transform_1(%arg0: i32) -> (i32, i32) {
    %c0_i32 = arith.constant 0 : i32
    %c0_i32_0 = arith.constant 0 : i32
    return %arg0, %c0_i32 : i32, i32
  }
  func.func @transform_2(%arg0: i32) -> (i32, i32) {
    %c0_i32 = arith.constant 0 : i32
    %c0_i32_0 = arith.constant 0 : i32
    %c0_i32_1 = arith.constant 0 : i32
    return %c0_i32, %c0_i32_0 : i32, i32
  }
  func.func @transform_3(%arg0: i32) -> (i32, i32) {
    %c0_i32 = arith.constant 0 : i32
    %c0_i32_0 = arith.constant 0 : i32
    %c0_i32_1 = arith.constant 0 : i32
    return %c0_i32, %c0_i32_0 : i32, i32
  }
  func.func @transform_4(%arg0: i32) -> (i32, i32) {
    %c0_i32 = arith.constant 0 : i32
    %c0_i32_0 = arith.constant 0 : i32
    %c0_i32_1 = arith.constant 0 : i32
    return %c0_i32, %c0_i32_0 : i32, i32
  }
  func.func @transform_5(%arg0: i32) -> (i32, i32) {
    %c0_i32 = arith.constant 0 : i32
    %c0_i32_0 = arith.constant 0 : i32
    %c0_i32_1 = arith.constant 0 : i32
    return %c0_i32, %c0_i32_0 : i32, i32
  }
  func.func @transform_6(%arg0: i32) -> (i32, i32) {
    %c0_i32 = arith.constant 0 : i32
    %c0_i32_0 = arith.constant 0 : i32
    %c0_i32_1 = arith.constant 0 : i32
    return %c0_i32, %c0_i32_0 : i32, i32
  }
  func.func @transform_7(%arg0: i32) -> (i32, i32) {
    %c0_i32 = arith.constant 0 : i32
    %c0_i32_0 = arith.constant 0 : i32
    %c0_i32_1 = arith.constant 0 : i32
    return %c0_i32, %c0_i32_0 : i32, i32
  }
  func.func @transform_8(%arg0: i32) -> (i32, i32) {
    %c0_i32 = arith.constant 0 : i32
    %c0_i32_0 = arith.constant 0 : i32
    %c0_i32_1 = arith.constant 0 : i32
    return %c0_i32, %c0_i32_0 : i32, i32
  }
  func.func @transform_9(%arg0: i32) -> (i32, i32) {
    %c0_i32 = arith.constant 0 : i32
    %c0_i32_0 = arith.constant 0 : i32
    %c0_i32_1 = arith.constant 0 : i32
    return %c0_i32, %c0_i32_0 : i32, i32
  }
  func.func @transform_10(%arg0: i32) -> (i32, i32) {
    %c0_i32 = arith.constant 0 : i32
    %c0_i32_0 = arith.constant 0 : i32
    %c0_i32_1 = arith.constant 0 : i32
    return %c0_i32, %c0_i32_0 : i32, i32
  }
  func.func @transform_11(%arg0: i32) -> (i32, i32) {
    %c0_i32 = arith.constant 0 : i32
    %c0_i32_0 = arith.constant 0 : i32
    %c0_i32_1 = arith.constant 0 : i32
    return %c0_i32, %c0_i32_0 : i32, i32
  }
  func.func @transform_12(%arg0: i32) -> (i32, i32) {
    %c0_i32 = arith.constant 0 : i32
    %c0_i32_0 = arith.constant 0 : i32
    %c0_i32_1 = arith.constant 0 : i32
    return %c0_i32, %c0_i32_0 : i32, i32
  }
  func.func @transform_13(%arg0: i32) -> (i32, i32, i32) {
    %c0_i32 = arith.constant 0 : i32
    %c0_i32_0 = arith.constant 0 : i32
    %c0_i32_1 = arith.constant 0 : i32
    return %arg0, %c0_i32, %c0_i32_0 : i32, i32, i32
  }
}

</mosaic_0001>

<llo_original>
// kernel: tpu_custom_call.1
$region0: #{tpu_custom_call.1}
  #allocation0 [shape = 'u32[]', space=smem, size = 0x4, offset = 0x4, fixed_abs, tag = 'smem constant byte address 0x4 - core index']
  #allocation1 [shape = 'u32[72,128]{1,0:T(1,128)}', space=vmem, size = 0x9000, scoped, tag = 'internal scratch']
  #allocation2 [shape = 'f32[1,1]{1,0:T(1,128)S(1)}', space=vmem, size = 0x200, scoped, tag = 'scoped memory for tpu_custom_call.1']
  %s0 = inlined_call_operand.vmem [shape: f32[128,8], index: 0, kind: input, shape index: {}]
  %s1 = inlined_call_operand.vmem [shape: f32[128,4], index: 1, kind: input, shape index: {}]
  %s2 = inlined_call_operand.vmem [shape: bf16[8,128], index: 2, kind: input, shape index: {}]
  %s3 = inlined_call_operand.vmem [shape: bf16[4,128], index: 3, kind: input, shape index: {}]
  %s4 = inlined_call_operand.vmem [shape: f32[1,128], index: 4, kind: input, shape index: {}]
  %s5 = inlined_call_operand.vmem [shape: bf16[128,128], index: 5, kind: input, shape index: {}]
  %s6 = inlined_call_operand.vmem [shape: f32[1,128], index: 6, kind: input, shape index: {}]
  %s7 = inlined_call_operand.vmem [shape: bf16[128,128], index: 7, kind: input, shape index: {}]
  %s8 = inlined_call_operand.vmem [shape: f32[1,128], index: 8, kind: input, shape index: {}]
  %s9 = inlined_call_operand.vmem [shape: bf16[128,128], index: 9, kind: input, shape index: {}]
  %s10 = inlined_call_operand.vmem [shape: f32[1,128], index: 10, kind: input, shape index: {}]
  %s11 = inlined_call_operand.vmem [shape: f32[128,1], index: 11, kind: input, shape index: {}]
  %s12 = inlined_call_operand.<no memory space> [shape: f32[1,1], index: 12, kind: input, shape index: {}]
  %s13 = inlined_call_operand.hbm [shape: f32[1,1,128], index: 13, kind: output, shape index: {}]
  %s14 = sld [smem:[#allocation0]]
  $region62: #{tpu_custom_call.1} parent=0
    _
  %s16 = ssub.s32 1, %s14
  %s17 = scalar_select 0, %s16, %s14
  %v18 = vstv %s12
  %19 = vst [vmem:[#allocation2] sm:$0x1] %v18
  $region1: #{tpu_custom_call.1} parent=0
    #allocation3 [shape = 'u8[512]{0}', space=vmem, size = 0x400, scoped, tag = 'output window, operand 0, single buffered']
    #allocation4 [shape = 's32[1]{0}', space=sflag, size = 0x4, scoped, tag = 'scoped memory for tpu_custom_call.1']
    %20 = vsyncpa [#allocation4], 0
    // Predicated region
    $region2: #{tpu_custom_call.1} parent=1 // pred_check
      _
    $region3: #{tpu_custom_call.1} parent=1 // pred_check_branch
      %22 = sbr.rel (0) target = $region5
    $region4: #{tpu_custom_call.1} parent=1 // pred_region
      _
    $region5: #{tpu_custom_call.1} parent=1 // pred_fallthru
      _
    // Predicated region
    $region6: #{tpu_custom_call.1} parent=1 // pred_check
      _
    $region7: #{tpu_custom_call.1} parent=1 // pred_check_branch
      %24 = sbr.rel (0) target = $region9
    $region8: #{tpu_custom_call.1} parent=1 // pred_region
      _
    $region9: #{tpu_custom_call.1} parent=1 // pred_fallthru
      _
    // Predicated region
    $region10: #{tpu_custom_call.1} parent=1 // pred_check
      _
    $region11: #{tpu_custom_call.1} parent=1 // pred_check_branch
      %26 = sbr.rel (0) target = $region13
    $region12: #{tpu_custom_call.1} parent=1 // pred_region
      _
    $region13: #{tpu_custom_call.1} parent=1 // pred_fallthru
      _
    // Predicated region
    $region14: #{tpu_custom_call.1} parent=1 // pred_check
      _
    $region15: #{tpu_custom_call.1} parent=1 // pred_check_branch
      %28 = sbr.rel (0) target = $region17
    $region16: #{tpu_custom_call.1} parent=1 // pred_region
      _
    $region17: #{tpu_custom_call.1} parent=1 // pred_fallthru
      _
    // Predicated region
    $region18: #{tpu_custom_call.1} parent=1 // pred_check
      _
    $region19: #{tpu_custom_call.1} parent=1 // pred_check_branch
      %30 = sbr.rel (0) target = $region21
    $region20: #{tpu_custom_call.1} parent=1 // pred_region
      _
    $region21: #{tpu_custom_call.1} parent=1 // pred_fallthru
      _
    // Predicated region
    $region22: #{tpu_custom_call.1} parent=1 // pred_check
      _
    $region23: #{tpu_custom_call.1} parent=1 // pred_check_branch
      %32 = sbr.rel (0) target = $region25
    $region24: #{tpu_custom_call.1} parent=1 // pred_region
      _
    $region25: #{tpu_custom_call.1} parent=1 // pred_fallthru
      _
    // Predicated region
    $region26: #{tpu_custom_call.1} parent=1 // pred_check
      _
    $region27: #{tpu_custom_call.1} parent=1 // pred_check_branch
      %34 = sbr.rel (0) target = $region29
    $region28: #{tpu_custom_call.1} parent=1 // pred_region
      _
    $region29: #{tpu_custom_call.1} parent=1 // pred_fallthru
      _
    // Predicated region
    $region30: #{tpu_custom_call.1} parent=1 // pred_check
      _
    $region31: #{tpu_custom_call.1} parent=1 // pred_check_branch
      %36 = sbr.rel (0) target = $region33
    $region32: #{tpu_custom_call.1} parent=1 // pred_region
      _
    $region33: #{tpu_custom_call.1} parent=1 // pred_fallthru
      _
    // Predicated region
    $region34: #{tpu_custom_call.1} parent=1 // pred_check
      _
    $region35: #{tpu_custom_call.1} parent=1 // pred_check_branch
      %38 = sbr.rel (0) target = $region37
    $region36: #{tpu_custom_call.1} parent=1 // pred_region
      _
    $region37: #{tpu_custom_call.1} parent=1 // pred_fallthru
      _
    // Predicated region
    $region38: #{tpu_custom_call.1} parent=1 // pred_check
      _
    $region39: #{tpu_custom_call.1} parent=1 // pred_check_branch
      %40 = sbr.rel (0) target = $region41
    $region40: #{tpu_custom_call.1} parent=1 // pred_region
      _
    $region41: #{tpu_custom_call.1} parent=1 // pred_fallthru
      _
    // Predicated region
    $region42: #{tpu_custom_call.1} parent=1 // pred_check
      _
    $region43: #{tpu_custom_call.1} parent=1 // pred_check_branch
      %42 = sbr.rel (0) target = $region45
    $region44: #{tpu_custom_call.1} parent=1 // pred_region
      _
    $region45: #{tpu_custom_call.1} parent=1 // pred_fallthru
      _
    // Predicated region
    $region46: #{tpu_custom_call.1} parent=1 // pred_check
      _
    $region47: #{tpu_custom_call.1} parent=1 // pred_check_branch
      %44 = sbr.rel (0) target = $region49
    $region48: #{tpu_custom_call.1} parent=1 // pred_region
      _
    $region49: #{tpu_custom_call.1} parent=1 // pred_fallthru
      _
    // Predicated region
    $region50: #{tpu_custom_call.1} parent=1 // pred_check
      _
    $region51: #{tpu_custom_call.1} parent=1 // pred_check_branch
      %46 = sbr.rel (0) target = $region53
    $region52: #{tpu_custom_call.1} parent=1 // pred_region
      _
    $region53: #{tpu_custom_call.1} parent=1 // pred_fallthru
      _
    %v48 = vld [vmem:[%s0] sm:$0xff]
    %v49 = vld [vmem:[%s0 + $0x8] sm:$0xff]
    %v50 = vld [vmem:[%s0 + $0x10] sm:$0xff]
    %v51 = vld [vmem:[%s0 + $0x18] sm:$0xff]
    %v52 = vld [vmem:[%s0 + $0x20] sm:$0xff]
    %v53 = vld [vmem:[%s0 + $0x28] sm:$0xff]
    %v54 = vld [vmem:[%s0 + $0x30] sm:$0xff]
    %v55 = vld [vmem:[%s0 + $0x38] sm:$0xff]
    %v56 = vld [vmem:[%s0 + $0x40] sm:$0xff]
    %v57 = vld [vmem:[%s0 + $0x48] sm:$0xff]
    %v58 = vld [vmem:[%s0 + $0x50] sm:$0xff]
    %v59 = vld [vmem:[%s0 + $0x58] sm:$0xff]
    %v60 = vld [vmem:[%s0 + $0x60] sm:$0xff]
    %v61 = vld [vmem:[%s0 + $0x68] sm:$0xff]
    %v62 = vld [vmem:[%s0 + $0x70] sm:$0xff]
    %v63 = vld [vmem:[%s0 + $0x78] sm:$0xff]
    %v64 = vpack.c.bf16 %v49, %v48
    %v65 = vpack.c.bf16 %v51, %v50
    %v66 = vpack.c.bf16 %v53, %v52
    %v67 = vpack.c.bf16 %v55, %v54
    %v68 = vpack.c.bf16 %v57, %v56
    %v69 = vpack.c.bf16 %v59, %v58
    %v70 = vpack.c.bf16 %v61, %v60
    %v71 = vpack.c.bf16 %v63, %v62
    %v72 = vld [vmem:[%s2] sm:$0xf]
    %v73 = vld [vmem:[%s1] sm:$0xff]
    %v74 = vld [vmem:[%s1 + $0x8] sm:$0xff]
    %v75 = vld [vmem:[%s1 + $0x10] sm:$0xff]
    %v76 = vld [vmem:[%s1 + $0x18] sm:$0xff]
    %v77 = vld [vmem:[%s1 + $0x20] sm:$0xff]
    %v78 = vld [vmem:[%s1 + $0x28] sm:$0xff]
    %v79 = vld [vmem:[%s1 + $0x30] sm:$0xff]
    %v80 = vld [vmem:[%s1 + $0x38] sm:$0xff]
    %v81 = vld [vmem:[%s1 + $0x40] sm:$0xff]
    %v82 = vld [vmem:[%s1 + $0x48] sm:$0xff]
    %v83 = vld [vmem:[%s1 + $0x50] sm:$0xff]
    %v84 = vld [vmem:[%s1 + $0x58] sm:$0xff]
    %v85 = vld [vmem:[%s1 + $0x60] sm:$0xff]
    %v86 = vld [vmem:[%s1 + $0x68] sm:$0xff]
    %v87 = vld [vmem:[%s1 + $0x70] sm:$0xff]
    %v88 = vld [vmem:[%s1 + $0x78] sm:$0xff]
    %v89 = vpack.c.bf16 %v74, %v73
    %v90 = vpack.c.bf16 %v76, %v75
    %v91 = vpack.c.bf16 %v78, %v77
    %v92 = vpack.c.bf16 %v80, %v79
    %v93 = vpack.c.bf16 %v82, %v81
    %v94 = vpack.c.bf16 %v84, %v83
    %v95 = vpack.c.bf16 %v86, %v85
    %v96 = vpack.c.bf16 %v88, %v87
    %v97 = vld [vmem:[%s3] sm:$0x3]
    %vm98 = vcmask 31744
    %v100 = vsel %vm98, %v89, 0
    %v103 = vsel %vm98, %v90, 0
    %v106 = vsel %vm98, %v91, 0
    %v109 = vsel %vm98, %v92, 0
    %v112 = vsel %vm98, %v93, 0
    %v115 = vsel %vm98, %v94, 0
    %v118 = vsel %vm98, %v95, 0
    %v121 = vsel %vm98, %v96, 0
    %vm123 = vcmask 1041408
    %v125 = vsel %vm123, %v97, 0
    %127 = vmatpush.bf16.msra.mxu0 0
    %128 = vmatpush.bf16.msra.mxu0 0
    %129 = vmatpush.bf16.msra.mxu0 0
    %130 = vmatpush.bf16.msra.mxu0 0
    %131 = vmatpush.bf16.msra.mxu0 0
    %132 = vmatpush.bf16.msra.mxu0 0
    %133 = vmatpush.bf16.msra.mxu0 0
    %134 = vmatpush.bf16.msra.mxu0 %v125
    %135 = vmatmul.bf16.gmra.mxu0 %v100
    %v136 = vpop.f32.mrf.mxu0
    %v137 = vadd.f32 0.0, %v136
    %v138 = vpop.f32.mrf.mxu0
    %v139 = vadd.f32 0.0, %v138
    %140 = vmatmul.bf16.gmra.mxu0 %v103
    %v141 = vpop.f32.mrf.mxu0
    %v142 = vadd.f32 0.0, %v141
    %v143 = vpop.f32.mrf.mxu0
    %v144 = vadd.f32 0.0, %v143
    %145 = vmatmul.bf16.gmra.mxu0 %v106
    %v146 = vpop.f32.mrf.mxu0
    %v147 = vadd.f32 0.0, %v146
    %v148 = vpop.f32.mrf.mxu0
    %v149 = vadd.f32 0.0, %v148
    %150 = vmatmul.bf16.gmra.mxu0 %v109
    %v151 = vpop.f32.mrf.mxu0
    %v152 = vadd.f32 0.0, %v151
    %v153 = vpop.f32.mrf.mxu0
    %v154 = vadd.f32 0.0, %v153
    %155 = vmatmul.bf16.gmra.mxu0 %v112
    %v156 = vpop.f32.mrf.mxu0
    %v157 = vadd.f32 0.0, %v156
    %v158 = vpop.f32.mrf.mxu0
    %v159 = vadd.f32 0.0, %v158
    %160 = vmatmul.bf16.gmra.mxu0 %v115
    %v161 = vpop.f32.mrf.mxu0
    %v162 = vadd.f32 0.0, %v161
    %v163 = vpop.f32.mrf.mxu0
    %v164 = vadd.f32 0.0, %v163
    %165 = vmatmul.bf16.gmra.mxu0 %v118
    %v166 = vpop.f32.mrf.mxu0
    %v167 = vadd.f32 0.0, %v166
    %v168 = vpop.f32.mrf.mxu0
    %v169 = vadd.f32 0.0, %v168
    %170 = vmatmul.bf16.gmra.mxu0 %v121
    %v171 = vpop.f32.mrf.mxu0
    %v172 = vadd.f32 0.0, %v171
    %v173 = vpop.f32.mrf.mxu0
    %v174 = vadd.f32 0.0, %v173
    %175 = vdwg.mxu0
    %vm176 = vcmask 64512
    %v178 = vsel %vm176, %v64, 0
    %v181 = vsel %vm176, %v65, 0
    %v184 = vsel %vm176, %v66, 0
    %v187 = vsel %vm176, %v67, 0
    %v190 = vsel %vm176, %v68, 0
    %v193 = vsel %vm176, %v69, 0
    %v196 = vsel %vm176, %v70, 0
    %v199 = vsel %vm176, %v71, 0
    %vm201 = vcmask 1043456
    %v203 = vsel %vm201, %v72, 0
    %205 = vmatpush.bf16.msra.mxu0 0
    %206 = vmatpush.bf16.msra.mxu0 0
    %207 = vmatpush.bf16.msra.mxu0 0
    %208 = vmatpush.bf16.msra.mxu0 0
    %209 = vmatpush.bf16.msra.mxu0 0
    %210 = vmatpush.bf16.msra.mxu0 0
    %211 = vmatpush.bf16.msra.mxu0 0
    %212 = vmatpush.bf16.msra.mxu0 %v203
    %213 = vmatmul.bf16.gmra.mxu0 %v178
    %v214 = vpop.f32.mrf.mxu0
    %v215 = vadd.f32 %v137, %v214
    %v216 = vpop.f32.mrf.mxu0
    %v217 = vadd.f32 %v139, %v216
    %218 = vmatmul.bf16.gmra.mxu0 %v181
    %v219 = vpop.f32.mrf.mxu0
    %v220 = vadd.f32 %v142, %v219
    %v221 = vpop.f32.mrf.mxu0
    %v222 = vadd.f32 %v144, %v221
    %223 = vmatmul.bf16.gmra.mxu0 %v184
    %v224 = vpop.f32.mrf.mxu0
    %v225 = vadd.f32 %v147, %v224
    %v226 = vpop.f32.mrf.mxu0
    %v227 = vadd.f32 %v149, %v226
    %228 = vmatmul.bf16.gmra.mxu0 %v187
    %v229 = vpop.f32.mrf.mxu0
    %v230 = vadd.f32 %v152, %v229
    %v231 = vpop.f32.mrf.mxu0
    %v232 = vadd.f32 %v154, %v231
    %233 = vmatmul.bf16.gmra.mxu0 %v190
    %v234 = vpop.f32.mrf.mxu0
    %v235 = vadd.f32 %v157, %v234
    %v236 = vpop.f32.mrf.mxu0
    %v237 = vadd.f32 %v159, %v236
    %238 = vmatmul.bf16.gmra.mxu0 %v193
    %v239 = vpop.f32.mrf.mxu0
    %v240 = vadd.f32 %v162, %v239
    %v241 = vpop.f32.mrf.mxu0
    %v242 = vadd.f32 %v164, %v241
    %243 = vmatmul.bf16.gmra.mxu0 %v196
    %v244 = vpop.f32.mrf.mxu0
    %v245 = vadd.f32 %v167, %v244
    %v246 = vpop.f32.mrf.mxu0
    %v247 = vadd.f32 %v169, %v246
    %248 = vmatmul.bf16.gmra.mxu0 %v199
    %v249 = vpop.f32.mrf.mxu0
    %v250 = vadd.f32 %v172, %v249
    %v251 = vpop.f32.mrf.mxu0
    %v252 = vadd.f32 %v174, %v251
    %253 = vdwg.mxu0
    %v254 = vld [vmem:[%s4] sm:$0x1]
    %v256 = vperm.slane %v254, 0
    %v258 = vadd.f32 %v215, %v256
    %v259 = vadd.f32 %v217, %v256
    %v260 = vadd.f32 %v220, %v256
    %v261 = vadd.f32 %v222, %v256
    %v262 = vadd.f32 %v225, %v256
    %v263 = vadd.f32 %v227, %v256
    %v264 = vadd.f32 %v230, %v256
    %v265 = vadd.f32 %v232, %v256
    %v266 = vadd.f32 %v235, %v256
    %v267 = vadd.f32 %v237, %v256
    %v268 = vadd.f32 %v240, %v256
    %v269 = vadd.f32 %v242, %v256
    %v270 = vadd.f32 %v245, %v256
    %v271 = vadd.f32 %v247, %v256
    %v272 = vadd.f32 %v250, %v256
    %v273 = vadd.f32 %v252, %v256
    %v274 = vmax.f32 %v258, 0.0
    %v275 = vmax.f32 %v259, 0.0
    %v276 = vmax.f32 %v260, 0.0
    %v277 = vmax.f32 %v261, 0.0
    %v278 = vmax.f32 %v262, 0.0
    %v279 = vmax.f32 %v263, 0.0
    %v280 = vmax.f32 %v264, 0.0
    %v281 = vmax.f32 %v265, 0.0
    %v282 = vmax.f32 %v266, 0.0
    %v283 = vmax.f32 %v267, 0.0
    %v284 = vmax.f32 %v268, 0.0
    %v285 = vmax.f32 %v269, 0.0
    %v286 = vmax.f32 %v270, 0.0
    %v287 = vmax.f32 %v271, 0.0
    %v288 = vmax.f32 %v272, 0.0
    %v289 = vmax.f32 %v273, 0.0
    %v290 = vpack.c.bf16 %v275, %v274
    %v291 = vpack.c.bf16 %v277, %v276
    %v292 = vpack.c.bf16 %v279, %v278
    %v293 = vpack.c.bf16 %v281, %v280
    %v294 = vpack.c.bf16 %v283, %v282
    %v295 = vpack.c.bf16 %v285, %v284
    %v296 = vpack.c.bf16 %v287, %v286
    %v297 = vpack.c.bf16 %v289, %v288
    %v298 = vld [vmem:[%s5] sm:$0xf]
    %v299 = vld [vmem:[%s5 + $0x4] sm:$0xf]
    %v300 = vld [vmem:[%s5 + $0x8] sm:$0xf]
    %v301 = vld [vmem:[%s5 + $0xc] sm:$0xf]
    %v302 = vld [vmem:[%s5 + $0x10] sm:$0xf]
    %v303 = vld [vmem:[%s5 + $0x14] sm:$0xf]
    %v304 = vld [vmem:[%s5 + $0x18] sm:$0xf]
    %v305 = vld [vmem:[%s5 + $0x1c] sm:$0xf]
    %v306 = vld [vmem:[%s5 + $0x20] sm:$0xf]
    %v307 = vld [vmem:[%s5 + $0x24] sm:$0xf]
    %v308 = vld [vmem:[%s5 + $0x28] sm:$0xf]
    %v309 = vld [vmem:[%s5 + $0x2c] sm:$0xf]
    %v310 = vld [vmem:[%s5 + $0x30] sm:$0xf]
    %v311 = vld [vmem:[%s5 + $0x34] sm:$0xf]
    %v312 = vld [vmem:[%s5 + $0x38] sm:$0xf]
    %v313 = vld [vmem:[%s5 + $0x3c] sm:$0xf]
    %v314 = vld [vmem:[%s6] sm:$0x1]
    %v316 = vperm.slane %v314, 0
    %v334 = vunpack.c.l.b16 %v298
    %v335 = vunpack.c.l.b16 %v299
    %v336 = vunpack.c.l.b16 %v300
    %v337 = vunpack.c.l.b16 %v301
    %v338 = vunpack.c.l.b16 %v302
    %v339 = vunpack.c.l.b16 %v303
    %v340 = vunpack.c.l.b16 %v304
    %v341 = vunpack.c.l.b16 %v305
    %v342 = vunpack.c.l.b16 %v306
    %v343 = vunpack.c.l.b16 %v307
    %v344 = vunpack.c.l.b16 %v308
    %v345 = vunpack.c.l.b16 %v309
    %v346 = vunpack.c.l.b16 %v310
    %v347 = vunpack.c.l.b16 %v311
    %v348 = vunpack.c.l.b16 %v312
    %v349 = vunpack.c.l.b16 %v313
    %v350 = vpack.c.b16 %v335, %v334
    %v351 = vpack.c.b16 %v337, %v336
    %v352 = vpack.c.b16 %v339, %v338
    %v353 = vpack.c.b16 %v341, %v340
    %v354 = vpack.c.b16 %v343, %v342
    %v355 = vpack.c.b16 %v345, %v344
    %v356 = vpack.c.b16 %v347, %v346
    %v357 = vpack.c.b16 %v349, %v348
    %366 = vmatpush.bf16.msra.mxu0 %v357
    %367 = vmatpush.bf16.msra.mxu0 %v356
    %368 = vmatpush.bf16.msra.mxu0 %v355
    %369 = vmatpush.bf16.msra.mxu0 %v354
    %370 = vmatpush.bf16.msra.mxu0 %v353
    %371 = vmatpush.bf16.msra.mxu0 %v352
    %372 = vmatpush.bf16.msra.mxu0 %v351
    %373 = vmatpush.bf16.msra.mxu0 %v350
    %374 = vmatmul.bf16.gmra.mxu0 %v290
    %v375 = vpop.f32.mrf.mxu0
    %v376 = vadd.f32 %v316, %v375
    %v377 = vpop.f32.mrf.mxu0
    %v378 = vadd.f32 %v316, %v377
    %379 = vmatmul.bf16.gmra.mxu0 %v291
    %v380 = vpop.f32.mrf.mxu0
    %v381 = vadd.f32 %v316, %v380
    %v382 = vpop.f32.mrf.mxu0
    %v383 = vadd.f32 %v316, %v382
    %384 = vmatmul.bf16.gmra.mxu0 %v292
    %v385 = vpop.f32.mrf.mxu0
    %v386 = vadd.f32 %v316, %v385
    %v387 = vpop.f32.mrf.mxu0
    %v388 = vadd.f32 %v316, %v387
    %389 = vmatmul.bf16.gmra.mxu0 %v293
    %v390 = vpop.f32.mrf.mxu0
    %v391 = vadd.f32 %v316, %v390
    %v392 = vpop.f32.mrf.mxu0
    %v393 = vadd.f32 %v316, %v392
    %394 = vmatmul.bf16.gmra.mxu0 %v294
    %v395 = vpop.f32.mrf.mxu0
    %v396 = vadd.f32 %v316, %v395
    %v397 = vpop.f32.mrf.mxu0
    %v398 = vadd.f32 %v316, %v397
    %399 = vmatmul.bf16.gmra.mxu0 %v295
    %v400 = vpop.f32.mrf.mxu0
    %v401 = vadd.f32 %v316, %v400
    %v402 = vpop.f32.mrf.mxu0
    %v403 = vadd.f32 %v316, %v402
    %404 = vmatmul.bf16.gmra.mxu0 %v296
    %v405 = vpop.f32.mrf.mxu0
    %v406 = vadd.f32 %v316, %v405
    %v407 = vpop.f32.mrf.mxu0
    %v408 = vadd.f32 %v316, %v407
    %409 = vmatmul.bf16.gmra.mxu0 %v297
    %v410 = vpop.f32.mrf.mxu0
    %v411 = vadd.f32 %v316, %v410
    %v412 = vpop.f32.mrf.mxu0
    %v413 = vadd.f32 %v316, %v412
    %414 = vdwg.mxu0
    %v415 = vmax.f32 %v376, 0.0
    %v416 = vmax.f32 %v378, 0.0
    %v417 = vmax.f32 %v381, 0.0
    %v418 = vmax.f32 %v383, 0.0
    %v419 = vmax.f32 %v386, 0.0
    %v420 = vmax.f32 %v388, 0.0
    %v421 = vmax.f32 %v391, 0.0
    %v422 = vmax.f32 %v393, 0.0
    %v423 = vmax.f32 %v396, 0.0
    %v424 = vmax.f32 %v398, 0.0
    %v425 = vmax.f32 %v401, 0.0
    %v426 = vmax.f32 %v403, 0.0
    %v427 = vmax.f32 %v406, 0.0
    %v428 = vmax.f32 %v408, 0.0
    %v429 = vmax.f32 %v411, 0.0
    %v430 = vmax.f32 %v413, 0.0
    %v431 = vpack.c.bf16 %v416, %v415
    %v432 = vpack.c.bf16 %v418, %v417
    %v433 = vpack.c.bf16 %v420, %v419
    %v434 = vpack.c.bf16 %v422, %v421
    %v435 = vpack.c.bf16 %v424, %v423
    %v436 = vpack.c.bf16 %v426, %v425
    %v437 = vpack.c.bf16 %v428, %v427
    %v438 = vpack.c.bf16 %v430, %v429
    %v439 = vld [vmem:[%s7] sm:$0xf]
    %v440 = vld [vmem:[%s7 + $0x4] sm:$0xf]
    %v441 = vld [vmem:[%s7 + $0x8] sm:$0xf]
    %v442 = vld [vmem:[%s7 + $0xc] sm:$0xf]
    %v443 = vld [vmem:[%s7 + $0x10] sm:$0xf]
    %v444 = vld [vmem:[%s7 + $0x14] sm:$0xf]
    %v445 = vld [vmem:[%s7 + $0x18] sm:$0xf]
    %v446 = vld [vmem:[%s7 + $0x1c] sm:$0xf]
    %v447 = vld [vmem:[%s7 + $0x20] sm:$0xf]
    %v448 = vld [vmem:[%s7 + $0x24] sm:$0xf]
    %v449 = vld [vmem:[%s7 + $0x28] sm:$0xf]
    %v450 = vld [vmem:[%s7 + $0x2c] sm:$0xf]
    %v451 = vld [vmem:[%s7 + $0x30] sm:$0xf]
    %v452 = vld [vmem:[%s7 + $0x34] sm:$0xf]
    %v453 = vld [vmem:[%s7 + $0x38] sm:$0xf]
    %v454 = vld [vmem:[%s7 + $0x3c] sm:$0xf]
    %v455 = vld [vmem:[%s8] sm:$0x1]
    %v457 = vperm.slane %v455, 0
    %v475 = vunpack.c.l.b16 %v439
    %v476 = vunpack.c.l.b16 %v440
    %v477 = vunpack.c.l.b16 %v441
    %v478 = vunpack.c.l.b16 %v442
    %v479 = vunpack.c.l.b16 %v443
    %v480 = vunpack.c.l.b16 %v444
    %v481 = vunpack.c.l.b16 %v445
    %v482 = vunpack.c.l.b16 %v446
    %v483 = vunpack.c.l.b16 %v447
    %v484 = vunpack.c.l.b16 %v448
    %v485 = vunpack.c.l.b16 %v449
    %v486 = vunpack.c.l.b16 %v450
    %v487 = vunpack.c.l.b16 %v451
    %v488 = vunpack.c.l.b16 %v452
    %v489 = vunpack.c.l.b16 %v453
    %v490 = vunpack.c.l.b16 %v454
    %v491 = vpack.c.b16 %v476, %v475
    %v492 = vpack.c.b16 %v478, %v477
    %v493 = vpack.c.b16 %v480, %v479
    %v494 = vpack.c.b16 %v482, %v481
    %v495 = vpack.c.b16 %v484, %v483
    %v496 = vpack.c.b16 %v486, %v485
    %v497 = vpack.c.b16 %v488, %v487
    %v498 = vpack.c.b16 %v490, %v489
    %507 = vmatpush.bf16.msra.mxu0 %v498
    %508 = vmatpush.bf16.msra.mxu0 %v497
    %509 = vmatpush.bf16.msra.mxu0 %v496
    %510 = vmatpush.bf16.msra.mxu0 %v495
    %511 = vmatpush.bf16.msra.mxu0 %v494
    %512 = vmatpush.bf16.msra.mxu0 %v493
    %513 = vmatpush.bf16.msra.mxu0 %v492
    %514 = vmatpush.bf16.msra.mxu0 %v491
    %515 = vmatmul.bf16.gmra.mxu0 %v431
    %v516 = vpop.f32.mrf.mxu0
    %v517 = vadd.f32 %v457, %v516
    %v518 = vpop.f32.mrf.mxu0
    %v519 = vadd.f32 %v457, %v518
    %520 = vmatmul.bf16.gmra.mxu0 %v432
    %v521 = vpop.f32.mrf.mxu0
    %v522 = vadd.f32 %v457, %v521
    %v523 = vpop.f32.mrf.mxu0
    %v524 = vadd.f32 %v457, %v523
    %525 = vmatmul.bf16.gmra.mxu0 %v433
    %v526 = vpop.f32.mrf.mxu0
    %v527 = vadd.f32 %v457, %v526
    %v528 = vpop.f32.mrf.mxu0
    %v529 = vadd.f32 %v457, %v528
    %530 = vmatmul.bf16.gmra.mxu0 %v434
    %v531 = vpop.f32.mrf.mxu0
    %v532 = vadd.f32 %v457, %v531
    %v533 = vpop.f32.mrf.mxu0
    %v534 = vadd.f32 %v457, %v533
    %535 = vmatmul.bf16.gmra.mxu0 %v435
    %v536 = vpop.f32.mrf.mxu0
    %v537 = vadd.f32 %v457, %v536
    %v538 = vpop.f32.mrf.mxu0
    %v539 = vadd.f32 %v457, %v538
    %540 = vmatmul.bf16.gmra.mxu0 %v436
    %v541 = vpop.f32.mrf.mxu0
    %v542 = vadd.f32 %v457, %v541
    %v543 = vpop.f32.mrf.mxu0
    %v544 = vadd.f32 %v457, %v543
    %545 = vmatmul.bf16.gmra.mxu0 %v437
    %v546 = vpop.f32.mrf.mxu0
    %v547 = vadd.f32 %v457, %v546
    %v548 = vpop.f32.mrf.mxu0
    %v549 = vadd.f32 %v457, %v548
    %550 = vmatmul.bf16.gmra.mxu0 %v438
    %v551 = vpop.f32.mrf.mxu0
    %v552 = vadd.f32 %v457, %v551
    %v553 = vpop.f32.mrf.mxu0
    %v554 = vadd.f32 %v457, %v553
    %555 = vdwg.mxu0
    %v556 = vmax.f32 %v517, 0.0
    %v557 = vmax.f32 %v519, 0.0
    %v558 = vmax.f32 %v522, 0.0
    %v559 = vmax.f32 %v524, 0.0
    %v560 = vmax.f32 %v527, 0.0
    %v561 = vmax.f32 %v529, 0.0
    %v562 = vmax.f32 %v532, 0.0
    %v563 = vmax.f32 %v534, 0.0
    %v564 = vmax.f32 %v537, 0.0
    %v565 = vmax.f32 %v539, 0.0
    %v566 = vmax.f32 %v542, 0.0
    %v567 = vmax.f32 %v544, 0.0
    %v568 = vmax.f32 %v547, 0.0
    %v569 = vmax.f32 %v549, 0.0
    %v570 = vmax.f32 %v552, 0.0
    %v571 = vmax.f32 %v554, 0.0
    %v572 = vpack.c.bf16 %v557, %v556
    %v573 = vpack.c.bf16 %v559, %v558
    %v574 = vpack.c.bf16 %v561, %v560
    %v575 = vpack.c.bf16 %v563, %v562
    %v576 = vpack.c.bf16 %v565, %v564
    %v577 = vpack.c.bf16 %v567, %v566
    %v578 = vpack.c.bf16 %v569, %v568
    %v579 = vpack.c.bf16 %v571, %v570
    %v580 = vld [vmem:[%s9] sm:$0xf]
    %v581 = vld [vmem:[%s9 + $0x4] sm:$0xf]
    %v582 = vld [vmem:[%s9 + $0x8] sm:$0xf]
    %v583 = vld [vmem:[%s9 + $0xc] sm:$0xf]
    %v584 = vld [vmem:[%s9 + $0x10] sm:$0xf]
    %v585 = vld [vmem:[%s9 + $0x14] sm:$0xf]
    %v586 = vld [vmem:[%s9 + $0x18] sm:$0xf]
    %v587 = vld [vmem:[%s9 + $0x1c] sm:$0xf]
    %v588 = vld [vmem:[%s9 + $0x20] sm:$0xf]
    %v589 = vld [vmem:[%s9 + $0x24] sm:$0xf]
    %v590 = vld [vmem:[%s9 + $0x28] sm:$0xf]
    %v591 = vld [vmem:[%s9 + $0x2c] sm:$0xf]
    %v592 = vld [vmem:[%s9 + $0x30] sm:$0xf]
    %v593 = vld [vmem:[%s9 + $0x34] sm:$0xf]
    %v594 = vld [vmem:[%s9 + $0x38] sm:$0xf]
    %v595 = vld [vmem:[%s9 + $0x3c] sm:$0xf]
    %v596 = vld [vmem:[%s10] sm:$0x1]
    %v598 = vperm.slane %v596, 0
    %v616 = vunpack.c.l.b16 %v580
    %v617 = vunpack.c.l.b16 %v581
    %v618 = vunpack.c.l.b16 %v582
    %v619 = vunpack.c.l.b16 %v583
    %v620 = vunpack.c.l.b16 %v584
    %v621 = vunpack.c.l.b16 %v585
    %v622 = vunpack.c.l.b16 %v586
    %v623 = vunpack.c.l.b16 %v587
    %v624 = vunpack.c.l.b16 %v588
    %v625 = vunpack.c.l.b16 %v589
    %v626 = vunpack.c.l.b16 %v590
    %v627 = vunpack.c.l.b16 %v591
    %v628 = vunpack.c.l.b16 %v592
    %v629 = vunpack.c.l.b16 %v593
    %v630 = vunpack.c.l.b16 %v594
    %v631 = vunpack.c.l.b16 %v595
    %v632 = vpack.c.b16 %v617, %v616
    %v633 = vpack.c.b16 %v619, %v618
    %v634 = vpack.c.b16 %v621, %v620
    %v635 = vpack.c.b16 %v623, %v622
    %v636 = vpack.c.b16 %v625, %v624
    %v637 = vpack.c.b16 %v627, %v626
    %v638 = vpack.c.b16 %v629, %v628
    %v639 = vpack.c.b16 %v631, %v630
    %648 = vmatpush.bf16.msra.mxu0 %v639
    %649 = vmatpush.bf16.msra.mxu0 %v638
    %650 = vmatpush.bf16.msra.mxu0 %v637
    %651 = vmatpush.bf16.msra.mxu0 %v636
    %652 = vmatpush.bf16.msra.mxu0 %v635
    %653 = vmatpush.bf16.msra.mxu0 %v634
    %654 = vmatpush.bf16.msra.mxu0 %v633
    %655 = vmatpush.bf16.msra.mxu0 %v632
    %656 = vmatmul.bf16.gmra.mxu0 %v572
    %v657 = vpop.f32.mrf.mxu0
    %v658 = vadd.f32 %v598, %v657
    %v659 = vpop.f32.mrf.mxu0
    %v660 = vadd.f32 %v598, %v659
    %661 = vmatmul.bf16.gmra.mxu0 %v573
    %v662 = vpop.f32.mrf.mxu0
    %v663 = vadd.f32 %v598, %v662
    %v664 = vpop.f32.mrf.mxu0
    %v665 = vadd.f32 %v598, %v664
    %666 = vmatmul.bf16.gmra.mxu0 %v574
    %v667 = vpop.f32.mrf.mxu0
    %v668 = vadd.f32 %v598, %v667
    %v669 = vpop.f32.mrf.mxu0
    %v670 = vadd.f32 %v598, %v669
    %671 = vmatmul.bf16.gmra.mxu0 %v575
    %v672 = vpop.f32.mrf.mxu0
    %v673 = vadd.f32 %v598, %v672
    %v674 = vpop.f32.mrf.mxu0
    %v675 = vadd.f32 %v598, %v674
    %676 = vmatmul.bf16.gmra.mxu0 %v576
    %v677 = vpop.f32.mrf.mxu0
    %v678 = vadd.f32 %v598, %v677
    %v679 = vpop.f32.mrf.mxu0
    %v680 = vadd.f32 %v598, %v679
    %681 = vmatmul.bf16.gmra.mxu0 %v577
    %v682 = vpop.f32.mrf.mxu0
    %v683 = vadd.f32 %v598, %v682
    %v684 = vpop.f32.mrf.mxu0
    %v685 = vadd.f32 %v598, %v684
    %686 = vmatmul.bf16.gmra.mxu0 %v578
    %v687 = vpop.f32.mrf.mxu0
    %v688 = vadd.f32 %v598, %v687
    %v689 = vpop.f32.mrf.mxu0
    %v690 = vadd.f32 %v598, %v689
    %691 = vmatmul.bf16.gmra.mxu0 %v579
    %v692 = vpop.f32.mrf.mxu0
    %v693 = vadd.f32 %v598, %v692
    %v694 = vpop.f32.mrf.mxu0
    %v695 = vadd.f32 %v598, %v694
    %696 = vdwg.mxu0
    %v697 = vmax.f32 %v658, 0.0
    %v698 = vmax.f32 %v660, 0.0
    %v699 = vmax.f32 %v663, 0.0
    %v700 = vmax.f32 %v665, 0.0
    %v701 = vmax.f32 %v668, 0.0
    %v702 = vmax.f32 %v670, 0.0
    %v703 = vmax.f32 %v673, 0.0
    %v704 = vmax.f32 %v675, 0.0
    %v705 = vmax.f32 %v678, 0.0
    %v706 = vmax.f32 %v680, 0.0
    %v707 = vmax.f32 %v683, 0.0
    %v708 = vmax.f32 %v685, 0.0
    %v709 = vmax.f32 %v688, 0.0
    %v710 = vmax.f32 %v690, 0.0
    %v711 = vmax.f32 %v693, 0.0
    %v712 = vmax.f32 %v695, 0.0
    %713 = vxpose.xlu0.b32.start [1/16] %v697, 128
    %714 = vxpose.xlu0.b32.cont [2/16] %v698, 128
    %715 = vxpose.xlu0.b32.cont [3/16] %v699, 128
    %716 = vxpose.xlu0.b32.cont [4/16] %v700, 128
    %717 = vxpose.xlu0.b32.cont [5/16] %v701, 128
    %718 = vxpose.xlu0.b32.cont [6/16] %v702, 128
    %719 = vxpose.xlu0.b32.cont [7/16] %v703, 128
    %720 = vxpose.xlu0.b32.cont [8/16] %v704, 128
    %721 = vxpose.xlu0.b32.cont [9/16] %v705, 128
    %722 = vxpose.xlu0.b32.cont [10/16] %v706, 128
    %723 = vxpose.xlu0.b32.cont [11/16] %v707, 128
    %724 = vxpose.xlu0.b32.cont [12/16] %v708, 128
    %725 = vxpose.xlu0.b32.cont [13/16] %v709, 128
    %726 = vxpose.xlu0.b32.cont [14/16] %v710, 128
    %727 = vxpose.xlu0.b32.cont [15/16] %v711, 128
    %728 = vxpose.xlu0.b32.end [16/16] %v712, 128
    %v729 = vpop.trf.xlu0
    %v730 = vpop.trf.xlu0
    %v731 = vpop.trf.xlu0
    %v732 = vpop.trf.xlu0
    %v733 = vpop.trf.xlu0
    %v734 = vpop.trf.xlu0
    %v735 = vpop.trf.xlu0
    %v736 = vpop.trf.xlu0
    %v737 = vpop.trf.xlu0
    %v738 = vpop.trf.xlu0
    %v739 = vpop.trf.xlu0
    %v740 = vpop.trf.xlu0
    %v741 = vpop.trf.xlu0
    %v742 = vpop.trf.xlu0
    %v743 = vpop.trf.xlu0
    %v744 = vpop.trf.xlu0
    %v745 = vld [vmem:[%s11] sm:$0xff]
    %v746 = vld [vmem:[%s11 + $0x8] sm:$0xff]
    %v747 = vld [vmem:[%s11 + $0x10] sm:$0xff]
    %v748 = vld [vmem:[%s11 + $0x18] sm:$0xff]
    %v749 = vld [vmem:[%s11 + $0x20] sm:$0xff]
    %v750 = vld [vmem:[%s11 + $0x28] sm:$0xff]
    %v751 = vld [vmem:[%s11 + $0x30] sm:$0xff]
    %v752 = vld [vmem:[%s11 + $0x38] sm:$0xff]
    %v753 = vld [vmem:[%s11 + $0x40] sm:$0xff]
    %v754 = vld [vmem:[%s11 + $0x48] sm:$0xff]
    %v755 = vld [vmem:[%s11 + $0x50] sm:$0xff]
    %v756 = vld [vmem:[%s11 + $0x58] sm:$0xff]
    %v757 = vld [vmem:[%s11 + $0x60] sm:$0xff]
    %v758 = vld [vmem:[%s11 + $0x68] sm:$0xff]
    %v759 = vld [vmem:[%s11 + $0x70] sm:$0xff]
    %v760 = vld [vmem:[%s11 + $0x78] sm:$0xff]
    %762 = vset.pattern.permute.xlu0 0
    %763 = vperm.xlu0 %762, %v745
    %v764 = vpop.permute.xlu0 %763
    %767 = vset.pattern.permute.xlu0 0
    %768 = vperm.xlu0 %767, %v746
    %v769 = vpop.permute.xlu0 %768
    %772 = vset.pattern.permute.xlu0 0
    %773 = vperm.xlu0 %772, %v747
    %v774 = vpop.permute.xlu0 %773
    %777 = vset.pattern.permute.xlu0 0
    %778 = vperm.xlu0 %777, %v748
    %v779 = vpop.permute.xlu0 %778
    %782 = vset.pattern.permute.xlu0 0
    %783 = vperm.xlu0 %782, %v749
    %v784 = vpop.permute.xlu0 %783
    %787 = vset.pattern.permute.xlu0 0
    %788 = vperm.xlu0 %787, %v750
    %v789 = vpop.permute.xlu0 %788
    %792 = vset.pattern.permute.xlu0 0
    %793 = vperm.xlu0 %792, %v751
    %v794 = vpop.permute.xlu0 %793
    %797 = vset.pattern.permute.xlu0 0
    %798 = vperm.xlu0 %797, %v752
    %v799 = vpop.permute.xlu0 %798
    %802 = vset.pattern.permute.xlu0 0
    %803 = vperm.xlu0 %802, %v753
    %v804 = vpop.permute.xlu0 %803
    %807 = vset.pattern.permute.xlu0 0
    %808 = vperm.xlu0 %807, %v754
    %v809 = vpop.permute.xlu0 %808
    %812 = vset.pattern.permute.xlu0 0
    %813 = vperm.xlu0 %812, %v755
    %v814 = vpop.permute.xlu0 %813
    %817 = vset.pattern.permute.xlu0 0
    %818 = vperm.xlu0 %817, %v756
    %v819 = vpop.permute.xlu0 %818
    %822 = vset.pattern.permute.xlu0 0
    %823 = vperm.xlu0 %822, %v757
    %v824 = vpop.permute.xlu0 %823
    %827 = vset.pattern.permute.xlu0 0
    %828 = vperm.xlu0 %827, %v758
    %v829 = vpop.permute.xlu0 %828
    %832 = vset.pattern.permute.xlu0 0
    %833 = vperm.xlu0 %832, %v759
    %v834 = vpop.permute.xlu0 %833
    %837 = vset.pattern.permute.xlu0 0
    %838 = vperm.xlu0 %837, %v760
    %v839 = vpop.permute.xlu0 %838
    %v841 = vmul.f32 %v729, %v764
    %v842 = vmul.f32 %v730, %v769
    %v843 = vmul.f32 %v731, %v774
    %v844 = vmul.f32 %v732, %v779
    %v845 = vmul.f32 %v733, %v784
    %v846 = vmul.f32 %v734, %v789
    %v847 = vmul.f32 %v735, %v794
    %v848 = vmul.f32 %v736, %v799
    %v849 = vmul.f32 %v737, %v804
    %v850 = vmul.f32 %v738, %v809
    %v851 = vmul.f32 %v739, %v814
    %v852 = vmul.f32 %v740, %v819
    %v853 = vmul.f32 %v741, %v824
    %v854 = vmul.f32 %v742, %v829
    %v855 = vmul.f32 %v743, %v834
    %v856 = vmul.f32 %v744, %v839
    %v857 = vadd.f32 %v841, %v842
    %v858 = vadd.f32 %v857, %v843
    %v859 = vadd.f32 %v858, %v844
    %v860 = vadd.f32 %v859, %v845
    %v861 = vadd.f32 %v860, %v846
    %v862 = vadd.f32 %v861, %v847
    %v863 = vadd.f32 %v862, %v848
    %v864 = vadd.f32 %v863, %v849
    %v865 = vadd.f32 %v864, %v850
    %v866 = vadd.f32 %v865, %v851
    %v867 = vadd.f32 %v866, %v852
    %v868 = vadd.f32 %v867, %v853
    %v869 = vadd.f32 %v868, %v854
    %v870 = vadd.f32 %v869, %v855
    %v871 = vadd.f32 %v870, %v856
    %v872 = vrot.slane %v871, 4
    %v873 = vadd.f32 %v871, %v872
    %v874 = vrot.slane %v873, 2
    %v875 = vadd.f32 %v873, %v874
    %v876 = vrot.slane %v875, 1
    %v877 = vadd.f32 %v875, %v876
    %v878 = vld [vmem:[#allocation2] sm:$0x1]
    %880 = vset.pattern.permute.xlu0 0
    %881 = vperm.xlu0 %880, %v878
    %v882 = vpop.permute.xlu0 %881
    %v884 = vperm.slane %v882, 0
    %v885 = vadd.f32 %v877, %v884
    %886 = vst [vmem:[#allocation3] sm:$0x1] %v885
    // Predicated region
    $region54: #{tpu_custom_call.1} parent=1 // pred_check
      _
    $region55: #{tpu_custom_call.1} parent=1 // pred_check_branch
      %888 = sbr.rel (0) target = $region57
    $region56: #{tpu_custom_call.1} parent=1 // pred_region
      %890 = vsyncadd [#allocation4], 0
      %s892 = sshll.u32 [#allocation3], 4
      %s893 = int_to_ptr.vmem [resolvable:$true] %s892
      %s894 = sshll.u32 %s13, 4
      %s895 = int_to_ptr.hbm [resolvable:$true] %s894
      %897 = dma.vmem_to_hbm [thread:$0]  %s893, 16, %s895, [#allocation4]
    $region57: #{tpu_custom_call.1} parent=1 // pred_fallthru
      _
    // Predicated region
    $region58: #{tpu_custom_call.1} parent=1 // pred_check
      _
    $region59: #{tpu_custom_call.1} parent=1 // pred_check_branch
      %899 = sbr.rel (0) target = $region61
    $region60: #{tpu_custom_call.1} parent=1 // pred_region
      %901 = dma.done [#allocation4], 16
    $region61: #{tpu_custom_call.1} parent=1 // pred_fallthru
      _
    %902 = vsyncpa [#allocation4], 1

</llo_original>
